<compile_context>
chip_gen: v7x
topology: tpu7x:2x2x1
jax: 0.10.0
libtpu: 0.0.40
codegen_flags: <defaults>
</compile_context>

<pallas_src>
import functools

import jax
import jax.numpy as jnp
from jax.experimental import pallas as pl
from jax.experimental.pallas import tpu as pltpu

_LANE = 128      # lane width (last dim multiple)
_SUBLANE = 8     # f32 sublane multiple (second-to-last dim)

# Keep the whole weight stack VMEM-resident (one grid step / batch tile) when
# it is at most this many bytes.  Conservative w.r.t. v7x's 64 MiB VMEM.
_RESIDENT_WEIGHT_BUDGET = 20 * 1024 * 1024


def _round_up(x, m):
    return (x + m - 1) // m * m


# --------------------------------------------------------------------------
# Kernels
# --------------------------------------------------------------------------
def _highway_resident_kernel(x_ref, w_ref, b_ref, o_ref):
    """All layers in one grid step; full weight stack resident in VMEM.

    x_ref: (tb, s_pad) input dtype
    w_ref: (L, s_pad, 3*s_pad) bf16, columns = [gate | nonlinear | linear]
    b_ref: (L, 1, 3*s_pad) f32
    o_ref: (tb, s_pad) f32
    """
    num_layers, s_pad, _ = w_ref.shape
    h = x_ref[...].astype(jnp.float32)
    for layer in range(num_layers):
        # One (tb, s_pad) x (s_pad, 3*s_pad) bf16 matmul -> gate/nl/lin pre-acts.
        pre = jnp.dot(h.astype(w_ref.dtype), w_ref[layer],
                      preferred_element_type=jnp.float32) + b_ref[layer]
        gate = 0.5 * (jnp.tanh(0.5 * pre[:, :s_pad]) + 1.0)     # == sigmoid, on EUP
        nonlinear = jnp.maximum(pre[:, s_pad:2 * s_pad], 0.0)    # f = ReLU
        linear = pre[:, 2 * s_pad:]
        # gate*nl + (1-gate)*lin  ==  lin + gate*(nl - lin)
        h = linear + gate * (nonlinear - linear)
    o_ref[...] = h


def _highway_streamed_kernel(x_ref, w_ref, b_ref, o_ref):
    """One layer per inner grid step; activation carried in the resident o_ref.

    Grid = (batch_tiles, num_layers); layer axis is 'arbitrary' and innermost.
    o_ref's block index is constant in the layer axis, so it stays VMEM-resident
    across layer steps and doubles as the f32 layer-to-layer carry.
    """
    layer = pl.program_id(1)
    s_pad = x_ref.shape[1]

    @pl.when(layer == 0)
    def _():
        o_ref[...] = x_ref[...].astype(jnp.float32)

    h = o_ref[...]
    pre = jnp.dot(h.astype(w_ref.dtype), w_ref[...],
                  preferred_element_type=jnp.float32) + b_ref[...]
    gate = 0.5 * (jnp.tanh(0.5 * pre[:, :s_pad]) + 1.0)
    nonlinear = jnp.maximum(pre[:, s_pad:2 * s_pad], 0.0)
    linear = pre[:, 2 * s_pad:]
    o_ref[...] = linear + gate * (nonlinear - linear)


# --------------------------------------------------------------------------
# Parameter init / packing
# --------------------------------------------------------------------------
def init_highway_params(key, size, num_layers, dtype=jnp.float32):
    """PyTorch nn.Linear-style init: W (out, in), b (out,), uniform(+-1/sqrt(size))."""
    bound = 1.0 / (size ** 0.5)
    params = []
    for _ in range(num_layers):
        layer = {}
        for name in ("nonlinear", "linear", "gate"):
            key, kw, kb = jax.random.split(key, 3)
            W = jax.random.uniform(kw, (size, size), dtype, -bound, bound)
            b = jax.random.uniform(kb, (size,), dtype, -bound, bound)
            layer[name] = (W, b)
        params.append(layer)
    return params


def pack_highway_params(params, size, weight_dtype=jnp.bfloat16):
    """Stack / zero-pad / pre-transpose weights for the fused kernel.

    Returns:
      w_all: (L, S_pad, 3*S_pad) weight_dtype, columns = [gate | nonlinear | linear]
      b_all: (L, 1, 3*S_pad) f32
    Padded rows/cols/biases are zero, so padded lanes never leak into real ones
    (gate pre-act 0 -> 0.5, but nonlinear == linear == 0 -> output 0).
    """
    s_pad = _round_up(size, _LANE)
    w_layers, b_layers = [], []
    for layer in params:
        w_blocks, b_blocks = [], []
        for name in ("gate", "nonlinear", "linear"):
            W, b = layer[name]
            Wt = jnp.zeros((s_pad, s_pad), jnp.float32).at[:size, :size].set(W.T)
            bp = jnp.zeros((s_pad,), jnp.float32).at[:size].set(b)
            w_blocks.append(Wt)
            b_blocks.append(bp)
        w_layers.append(jnp.concatenate(w_blocks, axis=1))            # (S_pad, 3*S_pad)
        b_layers.append(jnp.concatenate(b_blocks, axis=0)[None, :])   # (1, 3*S_pad)
    w_all = jnp.stack(w_layers).astype(weight_dtype)
    b_all = jnp.stack(b_layers).astype(jnp.float32)
    return w_all, b_all


# --------------------------------------------------------------------------
# Forward wrapper
# --------------------------------------------------------------------------
@functools.partial(jax.jit, static_argnames=("batch_tile", "layer_resident"))
def highway_forward(x, w_all, b_all, *, batch_tile=None, layer_resident=None):
    """x: (B, S).  w_all/b_all from pack_highway_params."""
    B, S = x.shape
    L, s_pad, three_s = w_all.shape

    # ---- batch tiling -----------------------------------------------------
    b_pad = _round_up(B, _SUBLANE)
    if batch_tile is None:
        if b_pad >= 1024:
            # Split across >=2 grid steps (feeds both v7x TCs) with an
            # MXU-friendly M (multiple of 256); cap tile to bound VMEM.
            tb = min(_round_up((b_pad + 1) // 2, 256), 2048)
        else:
            tb = b_pad
    else:
        tb = _round_up(min(batch_tile, b_pad), _SUBLANE)
    b_pad = _round_up(b_pad, tb)                       # tile divides padded batch

    x_pad = jnp.zeros((b_pad, s_pad), x.dtype).at[:B, :S].set(x)

    # ---- path selection + VMEM budget ------------------------------------
    w_bytes = (w_all.size * w_all.dtype.itemsize
               + b_all.size * b_all.dtype.itemsize)
    resident = (w_bytes <= _RESIDENT_WEIGHT_BUDGET
                if layer_resident is None else bool(layer_resident))

    act_bytes = 2 * tb * s_pad * (x.dtype.itemsize + 4)       # x + out, double-buffered
    if resident:
        w_tile_bytes = w_bytes                                 # whole stack, single buffer
    else:
        w_tile_bytes = 2 * (s_pad * three_s * w_all.dtype.itemsize + three_s * 4)
    vmem_limit = int(1.3 * (act_bytes + w_tile_bytes)) + (2 << 20)
    vmem_limit = min(max(vmem_limit, 8 << 20), 64 << 20)      # v7x physical ceiling

    # ---- pallas_call -------------------------------------------------------
    if resident:
        out = pl.pallas_call(
            _highway_resident_kernel,
            out_shape=jax.ShapeDtypeStruct((b_pad, s_pad), jnp.float32),
            grid=(b_pad // tb,),
            in_specs=[
                pl.BlockSpec((tb, s_pad), lambda bi: (bi, 0)),
                pl.BlockSpec((L, s_pad, three_s), lambda bi: (0, 0, 0)),
                pl.BlockSpec((L, 1, three_s), lambda bi: (0, 0, 0)),
            ],
            out_specs=pl.BlockSpec((tb, s_pad), lambda bi: (bi, 0)),
            compiler_params=pltpu.CompilerParams(
                dimension_semantics=("parallel",),
                vmem_limit_bytes=vmem_limit),
        )(x_pad, w_all, b_all)
    else:
        out = pl.pallas_call(
            _highway_streamed_kernel,
            out_shape=jax.ShapeDtypeStruct((b_pad, s_pad), jnp.float32),
            grid=(b_pad // tb, L),
            in_specs=[
                pl.BlockSpec((tb, s_pad), lambda bi, li: (bi, 0)),
                pl.BlockSpec((pl.Squeezed(), s_pad, three_s),
                             lambda bi, li: (li, 0, 0)),
                pl.BlockSpec((pl.Squeezed(), 1, three_s),
                             lambda bi, li: (li, 0, 0)),
            ],
            out_specs=pl.BlockSpec((tb, s_pad), lambda bi, li: (bi, 0)),
            compiler_params=pltpu.CompilerParams(
                dimension_semantics=("parallel", "arbitrary"),
                vmem_limit_bytes=vmem_limit),
        )(x_pad, w_all, b_all)

    return out[:B, :S].astype(x.dtype)


# --------------------------------------------------------------------------
# Pure-JAX reference (PyTorch eval-mode semantics)
# --------------------------------------------------------------------------
def reference_forward(x, params, weight_dtype=jnp.float32):
    """weight_dtype=bf16 emulates the kernel's bf16-operand / f32-accumulate matmuls."""
    h = x.astype(jnp.float32)
    for layer in params:
        def lin(W, b):
            return jnp.dot(h.astype(weight_dtype), W.T.astype(weight_dtype),
                           preferred_element_type=jnp.float32) + b
        gate = jax.nn.sigmoid(lin(*layer["gate"]))
        nonlinear = jax.nn.relu(lin(*layer["nonlinear"]))
        linear = lin(*layer["linear"])
        h = gate * nonlinear + (1.0 - gate) * linear
    return h


if __name__ == "__main__":
    batch = 8
    size = 32
    num_layers = 2

    key = jax.random.PRNGKey(0)
    key, kx = jax.random.split(key)
    x = jax.random.normal(kx, (batch, size), jnp.float32)

    params = init_highway_params(key, size, num_layers)
    w_all, b_all = pack_highway_params(params, size)   # bf16 weights, f32 biases

    # Auto path: weights fit VMEM -> resident path (no layer grid axis).
    out = jax.block_until_ready(highway_forward(x, w_all, b_all))

    # Also exercise the streamed (per-layer grid axis) path.
    out_streamed = jax.block_until_ready(
        highway_forward(x, w_all, b_all, layer_resident=False))

    ref_bf16 = reference_forward(x, params, weight_dtype=jnp.bfloat16)
    ref_f32 = reference_forward(x, params)

    assert out.shape == (batch, size)
    assert jnp.allclose(out, ref_bf16, atol=5e-3, rtol=5e-3), \
        "resident path mismatch vs bf16 reference"
    assert jnp.allclose(out_streamed, ref_bf16, atol=5e-3, rtol=5e-3), \
        "streamed path mismatch vs bf16 reference"
    assert jnp.allclose(out, ref_f32, atol=5e-2, rtol=5e-2), \
        "sanity mismatch vs f32 reference"

    print("KERNEL_OK")
</pallas_src>

<mosaic_0001>
module attributes {stable_mosaic.version = 11 : i64} {
  func.func @_highway_resident_kernel(%arg0: i32, %arg1: memref<8x128xf32, #tpu.memory_space<vmem>>, %arg2: memref<2x128x384xbf16, #tpu.memory_space<vmem>>, %arg3: memref<2x1x384xf32, #tpu.memory_space<vmem>>, %arg4: memref<8x128xf32, #tpu.memory_space<vmem>>) attributes {dimension_semantics = [#tpu.dimension_semantics<parallel>], iteration_bounds = array<i64: 1>, scalar_prefetch = 0 : i64, scratch_operands = 0 : i64, tpu.core_type = #tpu.core_type<tc>, window_params = [{transform_indices = @transform_0, window_bounds = array<i64: 8, 128>}, {pipeline_mode = #tpu.pipeline_mode<synchronous>, transform_indices = @transform_1, window_bounds = array<i64: 2, 128, 384>}, {pipeline_mode = #tpu.pipeline_mode<synchronous>, transform_indices = @transform_2, window_bounds = array<i64: 2, 1, 384>}, {transform_indices = @transform_3, window_bounds = array<i64: 8, 128>}]} {
    %c0 = arith.constant 0 : index
    %c0_0 = arith.constant 0 : index
    %0 = vector.load %arg1[%c0, %c0_0] : memref<8x128xf32, #tpu.memory_space<vmem>>, vector<8x128xf32>
    %1 = arith.truncf %0 : vector<8x128xf32> to vector<8x128xbf16>
    %c0_1 = arith.constant 0 : index
    %c0_2 = arith.constant 0 : index
    %c0_3 = arith.constant 0 : index
    %2 = vector.load %arg2[%c0_1, %c0_2, %c0_3] : memref<2x128x384xbf16, #tpu.memory_space<vmem>>, vector<1x128x384xbf16>
    %3 = vector.shape_cast %2 : vector<1x128x384xbf16> to vector<128x384xbf16>
    %cst = arith.constant dense<0.000000e+00> : vector<8x384xf32>
    %4 = tpu.matmul %1, %3, %cst {dimension_numbers = #tpu.dot_dimension_numbers<[1], [0], [0], [1], [0, 0, 1, 1], [], []>} : vector<8x128xbf16>, vector<128x384xbf16>, vector<8x384xf32> -> vector<8x384xf32>
    %c0_4 = arith.constant 0 : index
    %c0_5 = arith.constant 0 : index
    %c0_6 = arith.constant 0 : index
    %5 = vector.load %arg3[%c0_4, %c0_5, %c0_6] : memref<2x1x384xf32, #tpu.memory_space<vmem>>, vector<1x1x384xf32>
    %6 = vector.shape_cast %5 : vector<1x1x384xf32> to vector<1x384xf32>
    %7 = vector.broadcast %6 : vector<1x384xf32> to vector<8x384xf32>
    %8 = arith.addf %4, %7 : vector<8x384xf32>
    %9 = vector.extract_strided_slice %8 {offsets = [0, 0], sizes = [8, 128], strides = [1, 1]} : vector<8x384xf32> to vector<8x128xf32>
    %cst_7 = arith.constant 5.000000e-01 : f32
    %10 = vector.broadcast %cst_7 : f32 to vector<8x128xf32>
    %11 = arith.mulf %10, %9 : vector<8x128xf32>
    %12 = math.tanh %11 : vector<8x128xf32>
    %cst_8 = arith.constant 1.000000e+00 : f32
    %13 = vector.broadcast %cst_8 : f32 to vector<8x128xf32>
    %14 = arith.addf %12, %13 : vector<8x128xf32>
    %cst_9 = arith.constant 5.000000e-01 : f32
    %15 = vector.broadcast %cst_9 : f32 to vector<8x128xf32>
    %16 = arith.mulf %15, %14 : vector<8x128xf32>
    %17 = vector.extract_strided_slice %8 {offsets = [0, 128], sizes = [8, 128], strides = [1, 1]} : vector<8x384xf32> to vector<8x128xf32>
    %cst_10 = arith.constant 0.000000e+00 : f32
    %18 = vector.broadcast %cst_10 : f32 to vector<8x128xf32>
    %19 = arith.maximumf %17, %18 : vector<8x128xf32>
    %20 = vector.extract_strided_slice %8 {offsets = [0, 256], sizes = [8, 128], strides = [1, 1]} : vector<8x384xf32> to vector<8x128xf32>
    %21 = arith.subf %19, %20 : vector<8x128xf32>
    %22 = arith.mulf %16, %21 : vector<8x128xf32>
    %23 = arith.addf %20, %22 : vector<8x128xf32>
    %24 = arith.truncf %23 : vector<8x128xf32> to vector<8x128xbf16>
    %c1 = arith.constant 1 : index
    %c0_11 = arith.constant 0 : index
    %c0_12 = arith.constant 0 : index
    %25 = vector.load %arg2[%c1, %c0_11, %c0_12] : memref<2x128x384xbf16, #tpu.memory_space<vmem>>, vector<1x128x384xbf16>
    %26 = vector.shape_cast %25 : vector<1x128x384xbf16> to vector<128x384xbf16>
    %cst_13 = arith.constant dense<0.000000e+00> : vector<8x384xf32>
    %27 = tpu.matmul %24, %26, %cst_13 {dimension_numbers = #tpu.dot_dimension_numbers<[1], [0], [0], [1], [0, 0, 1, 1], [], []>} : vector<8x128xbf16>, vector<128x384xbf16>, vector<8x384xf32> -> vector<8x384xf32>
    %c1_14 = arith.constant 1 : index
    %c0_15 = arith.constant 0 : index
    %c0_16 = arith.constant 0 : index
    %28 = vector.load %arg3[%c1_14, %c0_15, %c0_16] : memref<2x1x384xf32, #tpu.memory_space<vmem>>, vector<1x1x384xf32>
    %29 = vector.shape_cast %28 : vector<1x1x384xf32> to vector<1x384xf32>
    %30 = vector.broadcast %29 : vector<1x384xf32> to vector<8x384xf32>
    %31 = arith.addf %27, %30 : vector<8x384xf32>
    %32 = vector.extract_strided_slice %31 {offsets = [0, 0], sizes = [8, 128], strides = [1, 1]} : vector<8x384xf32> to vector<8x128xf32>
    %cst_17 = arith.constant 5.000000e-01 : f32
    %33 = vector.broadcast %cst_17 : f32 to vector<8x128xf32>
    %34 = arith.mulf %33, %32 : vector<8x128xf32>
    %35 = math.tanh %34 : vector<8x128xf32>
    %cst_18 = arith.constant 1.000000e+00 : f32
    %36 = vector.broadcast %cst_18 : f32 to vector<8x128xf32>
    %37 = arith.addf %35, %36 : vector<8x128xf32>
    %cst_19 = arith.constant 5.000000e-01 : f32
    %38 = vector.broadcast %cst_19 : f32 to vector<8x128xf32>
    %39 = arith.mulf %38, %37 : vector<8x128xf32>
    %40 = vector.extract_strided_slice %31 {offsets = [0, 128], sizes = [8, 128], strides = [1, 1]} : vector<8x384xf32> to vector<8x128xf32>
    %cst_20 = arith.constant 0.000000e+00 : f32
    %41 = vector.broadcast %cst_20 : f32 to vector<8x128xf32>
    %42 = arith.maximumf %40, %41 : vector<8x128xf32>
    %43 = vector.extract_strided_slice %31 {offsets = [0, 256], sizes = [8, 128], strides = [1, 1]} : vector<8x384xf32> to vector<8x128xf32>
    %44 = arith.subf %42, %43 : vector<8x128xf32>
    %45 = arith.mulf %39, %44 : vector<8x128xf32>
    %46 = arith.addf %43, %45 : vector<8x128xf32>
    %c0_21 = arith.constant 0 : index
    %c0_22 = arith.constant 0 : index
    %47 = vector.load %arg4[%c0_21, %c0_22] : memref<8x128xf32, #tpu.memory_space<vmem>>, vector<8x128xf32>
    tpu.vector_store %arg4[%c0_21, %c0_22], %46 {strides = array<i32>} : memref<8x128xf32, #tpu.memory_space<vmem>>, vector<8x128xf32>,
    return
  }
  func.func @transform_0(%arg0: i32) -> (i32, i32) {
    %c0_i32 = arith.constant 0 : i32
    %c0_i32_0 = arith.constant 0 : i32
    return %arg0, %c0_i32 : i32, i32
  }
  func.func @transform_1(%arg0: i32) -> (i32, i32, i32) {
    %c0_i32 = arith.constant 0 : i32
    %c0_i32_0 = arith.constant 0 : i32
    %c0_i32_1 = arith.constant 0 : i32
    %c0_i32_2 = arith.constant 0 : i32
    return %c0_i32, %c0_i32_0, %c0_i32_1 : i32, i32, i32
  }
  func.func @transform_2(%arg0: i32) -> (i32, i32, i32) {
    %c0_i32 = arith.constant 0 : i32
    %c0_i32_0 = arith.constant 0 : i32
    %c0_i32_1 = arith.constant 0 : i32
    %c0_i32_2 = arith.constant 0 : i32
    return %c0_i32, %c0_i32_0, %c0_i32_1 : i32, i32, i32
  }
  func.func @transform_3(%arg0: i32) -> (i32, i32) {
    %c0_i32 = arith.constant 0 : i32
    %c0_i32_0 = arith.constant 0 : i32
    return %arg0, %c0_i32 : i32, i32
  }
}

</mosaic_0001>

<llo_original>
// kernel: highway_forward.1
$region0: #{highway_forward.1}
  #allocation0 [shape = 'u32[]', space=smem, size = 0x4, offset = 0x4, fixed_abs, tag = 'smem constant byte address 0x4 - core index']
  #allocation1 [shape = 'u32[144,128]{1,0:T(1,128)}', space=vmem, size = 0x12000, scoped, tag = 'internal scratch']
  %s0 = inlined_call_operand.vmem [shape: f32[8,128], index: 0, kind: input, shape index: {}]
  %s1 = inlined_call_operand.hbm [shape: bf16[2,128,384], index: 1, kind: input, shape index: {}]
  %s2 = inlined_call_operand.vmem [shape: f32[2,1,384], index: 2, kind: input, shape index: {}]
  %s3 = inlined_call_operand.hbm [shape: f32[8,128], index: 3, kind: output, shape index: {}]
  %s4 = sld [smem:[#allocation0]]
  $region26: #{highway_forward.1} parent=0
    _
  %s6 = ssub.s32 1, %s4
  %s7 = scalar_select 0, %s6, %s4
  $region1: #{highway_forward.1} parent=0
    #allocation2 [shape = 'u8[196608]{0}', space=vmem, size = 0x30000, scoped, tag = 'input window, operand 1, single buffered']
    #allocation3 [shape = 's32[1]{0}', space=sflag, size = 0x4, scoped, tag = 'scoped memory for highway_forward.1']
    #allocation4 [shape = 's32[1]{0}', space=sflag, size = 0x4, scoped, tag = 'scoped memory for highway_forward.1']
    #allocation5 [shape = 'u8[4096]{0}', space=vmem, size = 0x1000, scoped, tag = 'output window, operand 0, single buffered']
    %8 = vsyncpa [#allocation3], 0
    %9 = vsyncpa [#allocation4], 0
    // Predicated region
    $region2: #{highway_forward.1} parent=1 // pred_check
      _
    $region3: #{highway_forward.1} parent=1 // pred_check_branch
      %11 = sbr.rel (0) target = $region5
    $region4: #{highway_forward.1} parent=1 // pred_region
      _
    $region5: #{highway_forward.1} parent=1 // pred_fallthru
      _
    // Predicated region
    $region6: #{highway_forward.1} parent=1 // pred_check
      _
    $region7: #{highway_forward.1} parent=1 // pred_check_branch
      %13 = sbr.rel (0) target = $region9
    $region8: #{highway_forward.1} parent=1 // pred_region
      %s15 = ssub.s32 6144, 6144
      %16 = vsyncadd [#allocation3], %s15
      %s17 = sshll.u32 [#allocation2], 4
      %s18 = int_to_ptr.vmem [resolvable:$true] %s17
      %23 = dma.hbm_to_vmem [thread:$0]  %s1, 6144, %s18, [#allocation3], 192, 192, 12
    $region9: #{highway_forward.1} parent=1 // pred_fallthru
      _
    // Predicated region
    $region10: #{highway_forward.1} parent=1 // pred_check
      _
    $region11: #{highway_forward.1} parent=1 // pred_check_branch
      %25 = sbr.rel (0) target = $region13
    $region12: #{highway_forward.1} parent=1 // pred_region
      _
    $region13: #{highway_forward.1} parent=1 // pred_fallthru
      _
    // Predicated region
    $region14: #{highway_forward.1} parent=1 // pred_check
      _
    $region15: #{highway_forward.1} parent=1 // pred_check_branch
      %27 = sbr.rel (0) target = $region17
    $region16: #{highway_forward.1} parent=1 // pred_region
      %28 = dma.done [#allocation3], 6144
    $region17: #{highway_forward.1} parent=1 // pred_fallthru
      _
    %v30 = vld [vmem:[%s0] sm:$0xff]
    %v31 = vpack.c.bf16 %v30, %v30
    %v32 = vld [vmem:[#allocation2] sm:$0xff]
    %v33 = vld [vmem:[#allocation2 + $0x8] sm:$0xf]
    %v34 = vld [vmem:[#allocation2 + $0xc] sm:$0xff]
    %v35 = vld [vmem:[#allocation2 + $0x14] sm:$0xf]
    %v36 = vld [vmem:[#allocation2 + $0x18] sm:$0xff]
    %v37 = vld [vmem:[#allocation2 + $0x20] sm:$0xf]
    %v38 = vld [vmem:[#allocation2 + $0x24] sm:$0xff]
    %v39 = vld [vmem:[#allocation2 + $0x2c] sm:$0xf]
    %v40 = vld [vmem:[#allocation2 + $0x30] sm:$0xff]
    %v41 = vld [vmem:[#allocation2 + $0x38] sm:$0xf]
    %v42 = vld [vmem:[#allocation2 + $0x3c] sm:$0xff]
    %v43 = vld [vmem:[#allocation2 + $0x44] sm:$0xf]
    %v44 = vld [vmem:[#allocation2 + $0x48] sm:$0xff]
    %v45 = vld [vmem:[#allocation2 + $0x50] sm:$0xf]
    %v46 = vld [vmem:[#allocation2 + $0x54] sm:$0xff]
    %v47 = vld [vmem:[#allocation2 + $0x5c] sm:$0xf]
    %v48 = vld [vmem:[#allocation2 + $0x60] sm:$0xff]
    %v49 = vld [vmem:[#allocation2 + $0x68] sm:$0xf]
    %v50 = vld [vmem:[#allocation2 + $0x6c] sm:$0xff]
    %v51 = vld [vmem:[#allocation2 + $0x74] sm:$0xf]
    %v52 = vld [vmem:[#allocation2 + $0x78] sm:$0xff]
    %v53 = vld [vmem:[#allocation2 + $0x80] sm:$0xf]
    %v54 = vld [vmem:[#allocation2 + $0x84] sm:$0xff]
    %v55 = vld [vmem:[#allocation2 + $0x8c] sm:$0xf]
    %v56 = vld [vmem:[#allocation2 + $0x90] sm:$0xff]
    %v57 = vld [vmem:[#allocation2 + $0x98] sm:$0xf]
    %v58 = vld [vmem:[#allocation2 + $0x9c] sm:$0xff]
    %v59 = vld [vmem:[#allocation2 + $0xa4] sm:$0xf]
    %v60 = vld [vmem:[#allocation2 + $0xa8] sm:$0xff]
    %v61 = vld [vmem:[#allocation2 + $0xb0] sm:$0xf]
    %v62 = vld [vmem:[#allocation2 + $0xb4] sm:$0xff]
    %v63 = vld [vmem:[#allocation2 + $0xbc] sm:$0xf]
    %v64 = vld [vmem:[%s2] sm:$0x7]
    %v66 = vlaneseq
    %v67 = vshrl.u32 %v66, 7
    %v68 = vsub.s32 0, %v67
    %v69 = vrot.slane %v64, %v68
    %v70 = vlaneseq
    %v71 = vshrl.u32 %v70, 7
    %v72 = vsub.s32 1, %v71
    %v73 = vrot.slane %v64, %v72
    %v74 = vlaneseq
    %v75 = vshrl.u32 %v74, 7
    %v76 = vsub.s32 2, %v75
    %v77 = vrot.slane %v64, %v76
    %v113 = vunpack.c.l.b16 %v32
    %v114 = vunpack.c.h.b16 %v32
    %v115 = vunpack.c.l.b16 %v33
    %v116 = vunpack.c.l.b16 %v34
    %v117 = vunpack.c.h.b16 %v34
    %v118 = vunpack.c.l.b16 %v35
    %v119 = vunpack.c.l.b16 %v36
    %v120 = vunpack.c.h.b16 %v36
    %v121 = vunpack.c.l.b16 %v37
    %v122 = vunpack.c.l.b16 %v38
    %v123 = vunpack.c.h.b16 %v38
    %v124 = vunpack.c.l.b16 %v39
    %v125 = vunpack.c.l.b16 %v40
    %v126 = vunpack.c.h.b16 %v40
    %v127 = vunpack.c.l.b16 %v41
    %v128 = vunpack.c.l.b16 %v42
    %v129 = vunpack.c.h.b16 %v42
    %v130 = vunpack.c.l.b16 %v43
    %v131 = vunpack.c.l.b16 %v44
    %v132 = vunpack.c.h.b16 %v44
    %v133 = vunpack.c.l.b16 %v45
    %v134 = vunpack.c.l.b16 %v46
    %v135 = vunpack.c.h.b16 %v46
    %v136 = vunpack.c.l.b16 %v47
    %v137 = vunpack.c.l.b16 %v48
    %v138 = vunpack.c.h.b16 %v48
    %v139 = vunpack.c.l.b16 %v49
    %v140 = vunpack.c.l.b16 %v50
    %v141 = vunpack.c.h.b16 %v50
    %v142 = vunpack.c.l.b16 %v51
    %v143 = vunpack.c.l.b16 %v52
    %v144 = vunpack.c.h.b16 %v52
    %v145 = vunpack.c.l.b16 %v53
    %v146 = vunpack.c.l.b16 %v54
    %v147 = vunpack.c.h.b16 %v54
    %v148 = vunpack.c.l.b16 %v55
    %v149 = vunpack.c.l.b16 %v56
    %v150 = vunpack.c.h.b16 %v56
    %v151 = vunpack.c.l.b16 %v57
    %v152 = vunpack.c.l.b16 %v58
    %v153 = vunpack.c.h.b16 %v58
    %v154 = vunpack.c.l.b16 %v59
    %v155 = vunpack.c.l.b16 %v60
    %v156 = vunpack.c.h.b16 %v60
    %v157 = vunpack.c.l.b16 %v61
    %v158 = vunpack.c.l.b16 %v62
    %v159 = vunpack.c.h.b16 %v62
    %v160 = vunpack.c.l.b16 %v63
    %v161 = vpack.c.b16 %v116, %v113
    %v162 = vpack.c.b16 %v117, %v114
    %v163 = vpack.c.b16 %v118, %v115
    %v164 = vpack.c.b16 %v122, %v119
    %v165 = vpack.c.b16 %v123, %v120
    %v166 = vpack.c.b16 %v124, %v121
    %v167 = vpack.c.b16 %v128, %v125
    %v168 = vpack.c.b16 %v129, %v126
    %v169 = vpack.c.b16 %v130, %v127
    %v170 = vpack.c.b16 %v134, %v131
    %v171 = vpack.c.b16 %v135, %v132
    %v172 = vpack.c.b16 %v136, %v133
    %v173 = vpack.c.b16 %v140, %v137
    %v174 = vpack.c.b16 %v141, %v138
    %v175 = vpack.c.b16 %v142, %v139
    %v176 = vpack.c.b16 %v146, %v143
    %v177 = vpack.c.b16 %v147, %v144
    %v178 = vpack.c.b16 %v148, %v145
    %v179 = vpack.c.b16 %v152, %v149
    %v180 = vpack.c.b16 %v153, %v150
    %v181 = vpack.c.b16 %v154, %v151
    %v182 = vpack.c.b16 %v158, %v155
    %v183 = vpack.c.b16 %v159, %v156
    %v184 = vpack.c.b16 %v160, %v157
    %209 = vmatprep.subr.bf16.mxu0 %v162
    %210 = vmatpush1.bf16.msra.mxu0 %v161
    %211 = vmatprep.subr.bf16.mxu0 %v165
    %212 = vmatpush1.bf16.msra.mxu0 %v164
    %213 = vmatprep.subr.bf16.mxu0 %v168
    %214 = vmatpush1.bf16.msra.mxu0 %v167
    %215 = vmatprep.subr.bf16.mxu0 %v171
    %216 = vmatpush1.bf16.msra.mxu0 %v170
    %217 = vmatprep.subr.bf16.mxu0 %v174
    %218 = vmatpush1.bf16.msra.mxu0 %v173
    %219 = vmatprep.subr.bf16.mxu0 %v177
    %220 = vmatpush1.bf16.msra.mxu0 %v176
    %221 = vmatprep.subr.bf16.mxu0 %v180
    %222 = vmatpush1.bf16.msra.mxu0 %v179
    %223 = vmatprep.subr.bf16.mxu0 %v183
    %224 = vmatpush1.bf16.msra.mxu0 %v182
    %225 = vmatprep.subr.bf16.mxu0 0
    %226 = vmatpush1.bf16.msra.mxu0 0
    %227 = vmatprep.subr.bf16.mxu0 0
    %228 = vmatpush1.bf16.msra.mxu0 0
    %229 = vmatprep.subr.bf16.mxu0 0
    %230 = vmatpush1.bf16.msra.mxu0 0
    %231 = vmatprep.subr.bf16.mxu0 0
    %232 = vmatpush1.bf16.msra.mxu0 0
    %233 = vmatprep.subr.bf16.mxu0 0
    %234 = vmatpush1.bf16.msra.mxu0 0
    %235 = vmatprep.subr.bf16.mxu0 0
    %236 = vmatpush1.bf16.msra.mxu0 0
    %237 = vmatprep.subr.bf16.mxu0 0
    %238 = vmatpush1.bf16.msra.mxu0 0
    %239 = vmatprep.subr.bf16.mxu0 0
    %240 = vmatpush1.bf16.msra.mxu0 0
    %241 = vmatprep.mubr.bf16.mxu0 0
    %242 = vmatmul.mubr.bf16.gmra.mrb[0].mxu0 %v31
    %v243 = vpop.f32.mrb[0].mxu0
    %v244 = vadd.f32 %v69, %v243
    %v245 = vpop.f32.mrb[0].mxu0
    %v246 = vadd.f32 %v73, %v245
    %v247 = vpop.f32.mrb[0].mxu0
    %v248 = vpop.f32.mrb[0].mxu0
    %249 = vdwg.mxu0
    %250 = vmatprep.subr.bf16.mxu0 0
    %251 = vmatpush1.bf16.msra.mxu0 %v163
    %252 = vmatprep.subr.bf16.mxu0 0
    %253 = vmatpush1.bf16.msra.mxu0 %v166
    %254 = vmatprep.subr.bf16.mxu0 0
    %255 = vmatpush1.bf16.msra.mxu0 %v169
    %256 = vmatprep.subr.bf16.mxu0 0
    %257 = vmatpush1.bf16.msra.mxu0 %v172
    %258 = vmatprep.subr.bf16.mxu0 0
    %259 = vmatpush1.bf16.msra.mxu0 %v175
    %260 = vmatprep.subr.bf16.mxu0 0
    %261 = vmatpush1.bf16.msra.mxu0 %v178
    %262 = vmatprep.subr.bf16.mxu0 0
    %263 = vmatpush1.bf16.msra.mxu0 %v181
    %264 = vmatprep.subr.bf16.mxu0 0
    %265 = vmatpush1.bf16.msra.mxu0 %v184
    %266 = vmatprep.subr.bf16.mxu0 0
    %267 = vmatpush1.bf16.msra.mxu0 0
    %268 = vmatprep.subr.bf16.mxu0 0
    %269 = vmatpush1.bf16.msra.mxu0 0
    %270 = vmatprep.subr.bf16.mxu0 0
    %271 = vmatpush1.bf16.msra.mxu0 0
    %272 = vmatprep.subr.bf16.mxu0 0
    %273 = vmatpush1.bf16.msra.mxu0 0
    %274 = vmatprep.subr.bf16.mxu0 0
    %275 = vmatpush1.bf16.msra.mxu0 0
    %276 = vmatprep.subr.bf16.mxu0 0
    %277 = vmatpush1.bf16.msra.mxu0 0
    %278 = vmatprep.subr.bf16.mxu0 0
    %279 = vmatpush1.bf16.msra.mxu0 0
    %280 = vmatprep.subr.bf16.mxu0 0
    %281 = vmatpush1.bf16.msra.mxu0 0
    %282 = vmatprep.mubr.bf16.mxu0 0
    %283 = vmatmul.mubr.bf16.gmra.mrb[0].mxu0 %v31
    %v284 = vpop.f32.mrb[0].mxu0
    %v285 = vadd.f32 %v77, %v284
    %v286 = vpop.f32.mrb[0].mxu0
    %v287 = vpop.f32.mrb[0].mxu0
    %v288 = vpop.f32.mrb[0].mxu0
    %289 = vdwg.mxu0
    %v290 = vmul.f32 %v244, 0.5
    %v291 = vtanh.pop %v290
    %v292 = vadd.f32 %v291, 1.0
    %v293 = vmul.f32 %v292, 0.5
    %v294 = vmax.f32 %v246, 0.0
    %v295 = vsub.f32 %v294, %v285
    %v296 = vmul.f32 %v293, %v295
    %v297 = vadd.f32 %v285, %v296
    %v298 = vpack.c.bf16 %v297, %v297
    %s299 = scalar_lea.vmem [#allocation2], 192
    %v300 = vld [vmem:[%s299] sm:$0xff]
    %v301 = vld [vmem:[%s299 + $0x8] sm:$0xf]
    %v302 = vld [vmem:[%s299 + $0xc] sm:$0xff]
    %v303 = vld [vmem:[%s299 + $0x14] sm:$0xf]
    %v304 = vld [vmem:[%s299 + $0x18] sm:$0xff]
    %v305 = vld [vmem:[%s299 + $0x20] sm:$0xf]
    %v306 = vld [vmem:[%s299 + $0x24] sm:$0xff]
    %v307 = vld [vmem:[%s299 + $0x2c] sm:$0xf]
    %v308 = vld [vmem:[%s299 + $0x30] sm:$0xff]
    %v309 = vld [vmem:[%s299 + $0x38] sm:$0xf]
    %v310 = vld [vmem:[%s299 + $0x3c] sm:$0xff]
    %v311 = vld [vmem:[%s299 + $0x44] sm:$0xf]
    %v312 = vld [vmem:[%s299 + $0x48] sm:$0xff]
    %v313 = vld [vmem:[%s299 + $0x50] sm:$0xf]
    %v314 = vld [vmem:[%s299 + $0x54] sm:$0xff]
    %v315 = vld [vmem:[%s299 + $0x5c] sm:$0xf]
    %v316 = vld [vmem:[%s299 + $0x60] sm:$0xff]
    %v317 = vld [vmem:[%s299 + $0x68] sm:$0xf]
    %v318 = vld [vmem:[%s299 + $0x6c] sm:$0xff]
    %v319 = vld [vmem:[%s299 + $0x74] sm:$0xf]
    %v320 = vld [vmem:[%s299 + $0x78] sm:$0xff]
    %v321 = vld [vmem:[%s299 + $0x80] sm:$0xf]
    %v322 = vld [vmem:[%s299 + $0x84] sm:$0xff]
    %v323 = vld [vmem:[%s299 + $0x8c] sm:$0xf]
    %v324 = vld [vmem:[%s299 + $0x90] sm:$0xff]
    %v325 = vld [vmem:[%s299 + $0x98] sm:$0xf]
    %v326 = vld [vmem:[%s299 + $0x9c] sm:$0xff]
    %v327 = vld [vmem:[%s299 + $0xa4] sm:$0xf]
    %v328 = vld [vmem:[%s299 + $0xa8] sm:$0xff]
    %v329 = vld [vmem:[%s299 + $0xb0] sm:$0xf]
    %v330 = vld [vmem:[%s299 + $0xb4] sm:$0xff]
    %v331 = vld [vmem:[%s299 + $0xbc] sm:$0xf]
    %s332 = scalar_lea.vmem %s2, 3
    %v333 = vld [vmem:[%s332] sm:$0x7]
    %v335 = vlaneseq
    %v336 = vshrl.u32 %v335, 7
    %v337 = vsub.s32 0, %v336
    %v338 = vrot.slane %v333, %v337
    %v339 = vlaneseq
    %v340 = vshrl.u32 %v339, 7
    %v341 = vsub.s32 1, %v340
    %v342 = vrot.slane %v333, %v341
    %v343 = vlaneseq
    %v344 = vshrl.u32 %v343, 7
    %v345 = vsub.s32 2, %v344
    %v346 = vrot.slane %v333, %v345
    %v382 = vunpack.c.l.b16 %v300
    %v383 = vunpack.c.h.b16 %v300
    %v384 = vunpack.c.l.b16 %v301
    %v385 = vunpack.c.l.b16 %v302
    %v386 = vunpack.c.h.b16 %v302
    %v387 = vunpack.c.l.b16 %v303
    %v388 = vunpack.c.l.b16 %v304
    %v389 = vunpack.c.h.b16 %v304
    %v390 = vunpack.c.l.b16 %v305
    %v391 = vunpack.c.l.b16 %v306
    %v392 = vunpack.c.h.b16 %v306
    %v393 = vunpack.c.l.b16 %v307
    %v394 = vunpack.c.l.b16 %v308
    %v395 = vunpack.c.h.b16 %v308
    %v396 = vunpack.c.l.b16 %v309
    %v397 = vunpack.c.l.b16 %v310
    %v398 = vunpack.c.h.b16 %v310
    %v399 = vunpack.c.l.b16 %v311
    %v400 = vunpack.c.l.b16 %v312
    %v401 = vunpack.c.h.b16 %v312
    %v402 = vunpack.c.l.b16 %v313
    %v403 = vunpack.c.l.b16 %v314
    %v404 = vunpack.c.h.b16 %v314
    %v405 = vunpack.c.l.b16 %v315
    %v406 = vunpack.c.l.b16 %v316
    %v407 = vunpack.c.h.b16 %v316
    %v408 = vunpack.c.l.b16 %v317
    %v409 = vunpack.c.l.b16 %v318
    %v410 = vunpack.c.h.b16 %v318
    %v411 = vunpack.c.l.b16 %v319
    %v412 = vunpack.c.l.b16 %v320
    %v413 = vunpack.c.h.b16 %v320
    %v414 = vunpack.c.l.b16 %v321
    %v415 = vunpack.c.l.b16 %v322
    %v416 = vunpack.c.h.b16 %v322
    %v417 = vunpack.c.l.b16 %v323
    %v418 = vunpack.c.l.b16 %v324
    %v419 = vunpack.c.h.b16 %v324
    %v420 = vunpack.c.l.b16 %v325
    %v421 = vunpack.c.l.b16 %v326
    %v422 = vunpack.c.h.b16 %v326
    %v423 = vunpack.c.l.b16 %v327
    %v424 = vunpack.c.l.b16 %v328
    %v425 = vunpack.c.h.b16 %v328
    %v426 = vunpack.c.l.b16 %v329
    %v427 = vunpack.c.l.b16 %v330
    %v428 = vunpack.c.h.b16 %v330
    %v429 = vunpack.c.l.b16 %v331
    %v430 = vpack.c.b16 %v385, %v382
    %v431 = vpack.c.b16 %v386, %v383
    %v432 = vpack.c.b16 %v387, %v384
    %v433 = vpack.c.b16 %v391, %v388
    %v434 = vpack.c.b16 %v392, %v389
    %v435 = vpack.c.b16 %v393, %v390
    %v436 = vpack.c.b16 %v397, %v394
    %v437 = vpack.c.b16 %v398, %v395
    %v438 = vpack.c.b16 %v399, %v396
    %v439 = vpack.c.b16 %v403, %v400
    %v440 = vpack.c.b16 %v404, %v401
    %v441 = vpack.c.b16 %v405, %v402
    %v442 = vpack.c.b16 %v409, %v406
    %v443 = vpack.c.b16 %v410, %v407
    %v444 = vpack.c.b16 %v411, %v408
    %v445 = vpack.c.b16 %v415, %v412
    %v446 = vpack.c.b16 %v416, %v413
    %v447 = vpack.c.b16 %v417, %v414
    %v448 = vpack.c.b16 %v421, %v418
    %v449 = vpack.c.b16 %v422, %v419
    %v450 = vpack.c.b16 %v423, %v420
    %v451 = vpack.c.b16 %v427, %v424
    %v452 = vpack.c.b16 %v428, %v425
    %v453 = vpack.c.b16 %v429, %v426
    %478 = vmatprep.subr.bf16.mxu0 %v431
    %479 = vmatpush1.bf16.msra.mxu0 %v430
    %480 = vmatprep.subr.bf16.mxu0 %v434
    %481 = vmatpush1.bf16.msra.mxu0 %v433
    %482 = vmatprep.subr.bf16.mxu0 %v437
    %483 = vmatpush1.bf16.msra.mxu0 %v436
    %484 = vmatprep.subr.bf16.mxu0 %v440
    %485 = vmatpush1.bf16.msra.mxu0 %v439
    %486 = vmatprep.subr.bf16.mxu0 %v443
    %487 = vmatpush1.bf16.msra.mxu0 %v442
    %488 = vmatprep.subr.bf16.mxu0 %v446
    %489 = vmatpush1.bf16.msra.mxu0 %v445
    %490 = vmatprep.subr.bf16.mxu0 %v449
    %491 = vmatpush1.bf16.msra.mxu0 %v448
    %492 = vmatprep.subr.bf16.mxu0 %v452
    %493 = vmatpush1.bf16.msra.mxu0 %v451
    %494 = vmatprep.subr.bf16.mxu0 0
    %495 = vmatpush1.bf16.msra.mxu0 0
    %496 = vmatprep.subr.bf16.mxu0 0
    %497 = vmatpush1.bf16.msra.mxu0 0
    %498 = vmatprep.subr.bf16.mxu0 0
    %499 = vmatpush1.bf16.msra.mxu0 0
    %500 = vmatprep.subr.bf16.mxu0 0
    %501 = vmatpush1.bf16.msra.mxu0 0
    %502 = vmatprep.subr.bf16.mxu0 0
    %503 = vmatpush1.bf16.msra.mxu0 0
    %504 = vmatprep.subr.bf16.mxu0 0
    %505 = vmatpush1.bf16.msra.mxu0 0
    %506 = vmatprep.subr.bf16.mxu0 0
    %507 = vmatpush1.bf16.msra.mxu0 0
    %508 = vmatprep.subr.bf16.mxu0 0
    %509 = vmatpush1.bf16.msra.mxu0 0
    %510 = vmatprep.mubr.bf16.mxu0 0
    %511 = vmatmul.mubr.bf16.gmra.mrb[0].mxu0 %v298
    %v512 = vpop.f32.mrb[0].mxu0
    %v513 = vadd.f32 %v338, %v512
    %v514 = vpop.f32.mrb[0].mxu0
    %v515 = vadd.f32 %v342, %v514
    %v516 = vpop.f32.mrb[0].mxu0
    %v517 = vpop.f32.mrb[0].mxu0
    %518 = vdwg.mxu0
    %519 = vmatprep.subr.bf16.mxu0 0
    %520 = vmatpush1.bf16.msra.mxu0 %v432
    %521 = vmatprep.subr.bf16.mxu0 0
    %522 = vmatpush1.bf16.msra.mxu0 %v435
    %523 = vmatprep.subr.bf16.mxu0 0
    %524 = vmatpush1.bf16.msra.mxu0 %v438
    %525 = vmatprep.subr.bf16.mxu0 0
    %526 = vmatpush1.bf16.msra.mxu0 %v441
    %527 = vmatprep.subr.bf16.mxu0 0
    %528 = vmatpush1.bf16.msra.mxu0 %v444
    %529 = vmatprep.subr.bf16.mxu0 0
    %530 = vmatpush1.bf16.msra.mxu0 %v447
    %531 = vmatprep.subr.bf16.mxu0 0
    %532 = vmatpush1.bf16.msra.mxu0 %v450
    %533 = vmatprep.subr.bf16.mxu0 0
    %534 = vmatpush1.bf16.msra.mxu0 %v453
    %535 = vmatprep.subr.bf16.mxu0 0
    %536 = vmatpush1.bf16.msra.mxu0 0
    %537 = vmatprep.subr.bf16.mxu0 0
    %538 = vmatpush1.bf16.msra.mxu0 0
    %539 = vmatprep.subr.bf16.mxu0 0
    %540 = vmatpush1.bf16.msra.mxu0 0
    %541 = vmatprep.subr.bf16.mxu0 0
    %542 = vmatpush1.bf16.msra.mxu0 0
    %543 = vmatprep.subr.bf16.mxu0 0
    %544 = vmatpush1.bf16.msra.mxu0 0
    %545 = vmatprep.subr.bf16.mxu0 0
    %546 = vmatpush1.bf16.msra.mxu0 0
    %547 = vmatprep.subr.bf16.mxu0 0
    %548 = vmatpush1.bf16.msra.mxu0 0
    %549 = vmatprep.subr.bf16.mxu0 0
    %550 = vmatpush1.bf16.msra.mxu0 0
    %551 = vmatprep.mubr.bf16.mxu0 0
    %552 = vmatmul.mubr.bf16.gmra.mrb[0].mxu0 %v298
    %v553 = vpop.f32.mrb[0].mxu0
    %v554 = vadd.f32 %v346, %v553
    %v555 = vpop.f32.mrb[0].mxu0
    %v556 = vpop.f32.mrb[0].mxu0
    %v557 = vpop.f32.mrb[0].mxu0
    %558 = vdwg.mxu0
    %v559 = vmul.f32 %v513, 0.5
    %v560 = vtanh.pop %v559
    %v561 = vadd.f32 %v560, 1.0
    %v562 = vmul.f32 %v561, 0.5
    %v563 = vmax.f32 %v515, 0.0
    %v564 = vsub.f32 %v563, %v554
    %v565 = vmul.f32 %v562, %v564
    %v566 = vadd.f32 %v554, %v565
    %567 = vst [vmem:[#allocation5] sm:$0xff] %v566
    // Predicated region
    $region18: #{highway_forward.1} parent=1 // pred_check
      _
    $region19: #{highway_forward.1} parent=1 // pred_check_branch
      %569 = sbr.rel (0) target = $region21
    $region20: #{highway_forward.1} parent=1 // pred_region
      %s571 = ssub.s32 128, 128
      %572 = vsyncadd [#allocation4], %s571
      %s574 = sshll.u32 [#allocation5], 4
      %s575 = int_to_ptr.vmem [resolvable:$true] %s574
      %577 = dma.vmem_to_hbm [thread:$0]  %s575, 128, %s3, [#allocation4]
    $region21: #{highway_forward.1} parent=1 // pred_fallthru
      _
    // Predicated region
    $region22: #{highway_forward.1} parent=1 // pred_check
      _
    $region23: #{highway_forward.1} parent=1 // pred_check_branch
      %579 = sbr.rel (0) target = $region25
    $region24: #{highway_forward.1} parent=1 // pred_region
      %580 = dma.done [#allocation4], 128
    $region25: #{highway_forward.1} parent=1 // pred_fallthru
      _
    %581 = vsyncpa [#allocation3], 1
    %582 = vsyncpa [#allocation4], 1

</llo_original>
